<compile_context>
chip_gen: v7x
topology: tpu7x:2x2x1
jax: 0.10.0
libtpu: 0.0.40
codegen_flags: <defaults>
</compile_context>

<pallas_src>
import functools

import jax
import jax.numpy as jnp
from jax.experimental import pallas as pl
from jax.experimental.pallas import tpu as pltpu


def _loss_kernel(pred_ref, batch_ref, out_ref, *, total_b):
    pred = pred_ref[...].astype(jnp.float32)    # (bs, T, Q)
    bat = batch_ref[...].astype(jnp.float32)    # (bs, T, 2Q)
    bs, T, Q = pred.shape

    correct = bat[:, :, :Q]                     # lane-aligned split (Q == 128k or full)
    wrong = bat[:, :, Q:]
    delta = correct + wrong                     # one-hot of the question asked at each step

    # p[s, t] = pred[s, t] . delta[s, t+1]   for t in [0, T-2]
    p = jnp.sum(pred[:, : T - 1, :] * delta[:, 1:, :], axis=-1)      # (bs, T-1)

    # a[s, t] = 1 iff the question at step t+1 was answered correctly
    a = jnp.sum(correct, axis=-1)[:, 1:]                             # (bs, T-1)

    # Mask students past the real batch size (ragged final block; no jnp.pad in
    # the wrapper).  `total_b` is a static Python int closed over the kernel.
    rows_left = total_b - pl.program_id(0) * bs
    row_ids = jax.lax.broadcasted_iota(jnp.int32, (bs, T - 1), 0)
    row_valid = row_ids < rows_left

    # Masked BCE: only steps with p > 0 contribute (padded / empty steps give p == 0).
    valid = (p > 0.0) & row_valid
    chosen = jnp.where(a > 0.5, p, 1.0 - p)                          # prob of observed label
    safe = jnp.where(valid, chosen, 1.0)                             # log(1) == 0 -> no-op
    block_loss = -jnp.sum(jnp.log(safe))

    # Lane-dense, per-block output tile (no cross-step accumulator -> "parallel" safe).
    out_ref[...] = jnp.full(out_ref.shape, block_loss, dtype=out_ref.dtype)


def _tpu_vmem_and_kind():
    vmem_cap = 64 * 1024 * 1024          # conservative fallback (v7x per-TC size)
    kind = ""
    try:
        vmem_cap = int(pltpu.get_tpu_info().vmem_capacity_bytes)
    except Exception:
        pass
    try:
        kind = jax.devices()[0].device_kind.lower()
    except Exception:
        pass
    return vmem_cap, kind


def _choose_block_students(B, T, Q, pred_itemsize, batch_itemsize, vmem_budget_bytes):
    """Students per block so double-buffered inputs + f32 temporaries fit the budget."""
    in_bytes = T * Q * pred_itemsize + T * 2 * Q * batch_itemsize    # one student, one buffer
    temps = 6 * T * Q * 4       # f32 upcast of pred + correct/wrong/delta/product + slack
    per_student = 2 * in_bytes + temps
    bs = vmem_budget_bytes // max(per_student, 1)
    bs = int(min(bs, B, 1024))
    if bs >= 8:
        bs = (bs // 8) * 8      # clean sublane tiling of the (bs, T-1) intermediates
    return max(1, bs)


def dkt_loss(pred, batch, block_students=None):
    """pred: (B, T, Q), batch: (B, T, 2Q)  ->  loss of shape (1,) f32."""
    pred = jnp.asarray(pred)    # keep native dtype; upcast happens per-tile in the kernel
    batch = jnp.asarray(batch)
    B, T, Q = pred.shape
    assert batch.shape == (B, T, 2 * Q)
    assert T >= 2

    vmem_cap, kind = _tpu_vmem_and_kind()
    # Explicit compiler limit: 3/4 of physical VMEM, capped at 96 MiB (v5e/v6e have
    # 128 MiB, v7x has 64 MiB/TC).  Leave ~8 MiB inside it for Mosaic scratch.
    vmem_limit = min((vmem_cap * 3) // 4, 96 * 1024 * 1024)
    vmem_budget = max(vmem_limit - 8 * 1024 * 1024, 8 * 1024 * 1024)

    if block_students is None:
        bs = _choose_block_students(
            B, T, Q, pred.dtype.itemsize, batch.dtype.itemsize, vmem_budget
        )
        # v7x has two TensorCores: make sure the "parallel" grid has >= 2 blocks.
        if ("v7" in kind or "tpu7" in kind) and bs >= B and B >= 2:
            bs = -(-B // 2)
    else:
        bs = int(max(1, min(block_students, B)))

    num_blocks = pl.cdiv(B, bs)
    kernel = functools.partial(_loss_kernel, total_b=B)

    partials = pl.pallas_call(
        kernel,
        out_shape=jax.ShapeDtypeStruct((num_blocks, 8, 128), jnp.float32),
        grid_spec=pltpu.PrefetchScalarGridSpec(
            num_scalar_prefetch=0,
            grid=(num_blocks,),
            in_specs=[
                pl.BlockSpec((bs, T, Q), lambda s: (s, 0, 0)),
                pl.BlockSpec((bs, T, 2 * Q), lambda s: (s, 0, 0)),
            ],
            out_specs=pl.BlockSpec((1, 8, 128), lambda s: (s, 0, 0)),
        ),
        compiler_params=pltpu.CompilerParams(
            dimension_semantics=("parallel",),   # each block writes its own output tile
            vmem_limit_bytes=int(vmem_limit),
        ),
    )(pred, batch)

    return jnp.sum(partials[:, 0, 0]).reshape(1)


def _reference_loss(pred, batch):
    """Plain-JAX reimplementation of the torch forward for verification."""
    pred = jnp.asarray(pred, jnp.float32)
    batch = jnp.asarray(batch, jnp.float32)
    B, T, Q = pred.shape
    total = jnp.float32(0.0)
    for s in range(B):
        correct = batch[s][:, :Q]
        wrong = batch[s][:, Q:]
        delta = correct + wrong
        temp = pred[s][: T - 1] @ delta[1:].T
        p = jnp.diagonal(temp)
        a = jnp.floor(((correct - wrong).sum(1) + 1.0) / 2.0)[1:]
        valid = p > 0
        safe_p = jnp.where(valid, p, 0.5)
        term = a * jnp.log(safe_p) + (1.0 - a) * jnp.log(1.0 - safe_p)
        total = total - jnp.sum(jnp.where(valid, term, 0.0))
    return jnp.asarray([total], dtype=jnp.float32)


def _make_inputs(key, B, T, Q):
    k_pred, k_qid, k_corr, k_len = jax.random.split(key, 4)
    pred = jax.nn.sigmoid(jax.random.normal(k_pred, (B, T, Q), dtype=jnp.float32))
    qid = jax.random.randint(k_qid, (B, T), 0, Q)
    corr = jax.random.bernoulli(k_corr, 0.5, (B, T)).astype(jnp.float32)
    onehot = jax.nn.one_hot(qid, Q, dtype=jnp.float32)
    batch_arr = jnp.concatenate(
        [onehot * corr[..., None], onehot * (1.0 - corr[..., None])], axis=-1
    )
    # variable sequence lengths -> trailing all-zero rows exercise the p == 0 mask
    seq_lens = jax.random.randint(k_len, (B,), 2, T + 1)
    valid_mask = (jnp.arange(T)[None, :] < seq_lens[:, None]).astype(jnp.float32)
    return pred, batch_arr * valid_mask[..., None]


if __name__ == "__main__":
    # NUM_OF_QUESTIONS = 128, MAX_STEP = 16 — small synthetic shapes.
    T, Q = 16, 128
    key = jax.random.PRNGKey(0)
    k1, k2 = jax.random.split(key)

    # Case 1: B = 2, auto block size -> single block (or 2 blocks on v7x).
    pred, batch_arr = _make_inputs(k1, 2, T, Q)
    loss = jax.block_until_ready(dkt_loss(pred, batch_arr))
    ref = _reference_loss(pred, batch_arr)
    assert loss.shape == (1,)
    assert jnp.allclose(loss, ref, rtol=1e-5, atol=1e-4), (loss, ref)

    # Case 2: B = 5 with a forced small block size -> multi-block grid with a
    # ragged final block (exercises the in-kernel tail-row mask, no jnp.pad).
    pred2, batch_arr2 = _make_inputs(k2, 5, T, Q)
    loss2 = jax.block_until_ready(dkt_loss(pred2, batch_arr2, block_students=2))
    ref2 = _reference_loss(pred2, batch_arr2)
    assert loss2.shape == (1,)
    assert jnp.allclose(loss2, ref2, rtol=1e-5, atol=1e-4), (loss2, ref2)

    print("KERNEL_OK")
</pallas_src>

<mosaic_0001>
module attributes {stable_mosaic.version = 11 : i64} {
  func.func @_loss_kernel(%arg0: i32, %arg1: memref<2x16x128xf32, #tpu.memory_space<vmem>>, %arg2: memref<2x16x256xf32, #tpu.memory_space<vmem>>, %arg3: memref<1x8x128xf32, #tpu.memory_space<vmem>>) attributes {dimension_semantics = [#tpu.dimension_semantics<parallel>], iteration_bounds = array<i64: 1>, scalar_prefetch = 0 : i64, scratch_operands = 0 : i64, tpu.core_type = #tpu.core_type<tc>, window_params = [{transform_indices = @transform_0, window_bounds = array<i64: 2, 16, 128>}, {transform_indices = @transform_1, window_bounds = array<i64: 2, 16, 256>}, {transform_indices = @transform_2, window_bounds = array<i64: 1, 8, 128>}]} {
    %c0 = arith.constant 0 : index
    %c0_0 = arith.constant 0 : index
    %c0_1 = arith.constant 0 : index
    %0 = vector.load %arg1[%c0, %c0_0, %c0_1] : memref<2x16x128xf32, #tpu.memory_space<vmem>>, vector<2x16x128xf32>
    %c0_2 = arith.constant 0 : index
    %c0_3 = arith.constant 0 : index
    %c0_4 = arith.constant 0 : index
    %1 = vector.load %arg2[%c0_2, %c0_3, %c0_4] : memref<2x16x256xf32, #tpu.memory_space<vmem>>, vector<2x16x256xf32>
    %2 = vector.extract_strided_slice %1 {offsets = [0, 0, 0], sizes = [2, 16, 128], strides = [1, 1, 1]} : vector<2x16x256xf32> to vector<2x16x128xf32>
    %3 = vector.extract_strided_slice %1 {offsets = [0, 0, 128], sizes = [2, 16, 128], strides = [1, 1, 1]} : vector<2x16x256xf32> to vector<2x16x128xf32>
    %4 = arith.addf %2, %3 : vector<2x16x128xf32>
    %5 = vector.extract_strided_slice %0 {offsets = [0, 0, 0], sizes = [2, 15, 128], strides = [1, 1, 1]} : vector<2x16x128xf32> to vector<2x15x128xf32>
    %6 = vector.extract_strided_slice %4 {offsets = [0, 1, 0], sizes = [2, 15, 128], strides = [1, 1, 1]} : vector<2x16x128xf32> to vector<2x15x128xf32>
    %7 = arith.mulf %5, %6 : vector<2x15x128xf32>
    %cst = arith.constant dense<0.000000e+00> : vector<2x15xf32>
    %8 = vector.multi_reduction <add>, %7, %cst [2] : vector<2x15x128xf32> to vector<2x15xf32>
    %cst_5 = arith.constant dense<0.000000e+00> : vector<2x16xf32>
    %9 = vector.multi_reduction <add>, %2, %cst_5 [2] : vector<2x16x128xf32> to vector<2x16xf32>
    %10 = vector.extract_strided_slice %9 {offsets = [0, 1], sizes = [2, 15], strides = [1, 1]} : vector<2x16xf32> to vector<2x15xf32>
    %c2_i32 = arith.constant 2 : i32
    %11 = arith.muli %arg0, %c2_i32 : i32
    %c2_i32_6 = arith.constant 2 : i32
    %12 = arith.subi %c2_i32_6, %11 : i32
    %13 = tpu.iota {dimensions = array<i32: 0>} : vector<2x15xi32>
    %14 = vector.broadcast %12 : i32 to vector<2x15xi32>
    %15 = arith.cmpi slt, %13, %14 : vector<2x15xi32>
    %cst_7 = arith.constant 0.000000e+00 : f32
    %16 = vector.broadcast %cst_7 : f32 to vector<2x15xf32>
    %17 = arith.cmpf ogt, %8, %16 : vector<2x15xf32>
    %18 = arith.andi %17, %15 : vector<2x15xi1>
    %cst_8 = arith.constant 5.000000e-01 : f32
    %19 = vector.broadcast %cst_8 : f32 to vector<2x15xf32>
    %20 = arith.cmpf ogt, %10, %19 : vector<2x15xf32>
    %cst_9 = arith.constant 1.000000e+00 : f32
    %21 = vector.broadcast %cst_9 : f32 to vector<2x15xf32>
    %22 = arith.subf %21, %8 : vector<2x15xf32>
    %23 = arith.select %20, %8, %22 : vector<2x15xi1>, vector<2x15xf32>
    %cst_10 = arith.constant 1.000000e+00 : f32
    %24 = vector.broadcast %cst_10 : f32 to vector<2x15xf32>
    %25 = arith.select %18, %23, %24 : vector<2x15xi1>, vector<2x15xf32>
    %26 = math.log %25 : vector<2x15xf32>
    %27 = vector.shape_cast %26 : vector<2x15xf32> to vector<1x2x15xf32>
    %cst_11 = arith.constant dense<0.000000e+00> : vector<1xf32>
    %28 = vector.multi_reduction <add>, %27, %cst_11 [1, 2] : vector<1x2x15xf32> to vector<1xf32>
    %29 = vector.shape_cast %28 : vector<1xf32> to vector<1x1x1xf32>
    %30 = vector.extract %29[0, 0, 0] : f32 from vector<1x1x1xf32>
    %cst_12 = arith.constant 0.000000e+00 : f32
    %31 = arith.subf %cst_12, %30 : f32
    %32 = vector.broadcast %31 : f32 to vector<1x8x128xf32>
    %c0_13 = arith.constant 0 : index
    %c0_14 = arith.constant 0 : index
    %c0_15 = arith.constant 0 : index
    %33 = vector.load %arg3[%c0_13, %c0_14, %c0_15] : memref<1x8x128xf32, #tpu.memory_space<vmem>>, vector<1x8x128xf32>
    tpu.vector_store %arg3[%c0_13, %c0_14, %c0_15], %32 {strides = array<i32>} : memref<1x8x128xf32, #tpu.memory_space<vmem>>, vector<1x8x128xf32>,
    return
  }
  func.func @transform_0(%arg0: i32) -> (i32, i32, i32) {
    %c0_i32 = arith.constant 0 : i32
    %c0_i32_0 = arith.constant 0 : i32
    %c0_i32_1 = arith.constant 0 : i32
    return %arg0, %c0_i32, %c0_i32_0 : i32, i32, i32
  }
  func.func @transform_1(%arg0: i32) -> (i32, i32, i32) {
    %c0_i32 = arith.constant 0 : i32
    %c0_i32_0 = arith.constant 0 : i32
    %c0_i32_1 = arith.constant 0 : i32
    return %arg0, %c0_i32, %c0_i32_0 : i32, i32, i32
  }
  func.func @transform_2(%arg0: i32) -> (i32, i32, i32) {
    %c0_i32 = arith.constant 0 : i32
    %c0_i32_0 = arith.constant 0 : i32
    %c0_i32_1 = arith.constant 0 : i32
    return %arg0, %c0_i32, %c0_i32_0 : i32, i32, i32
  }
}

</mosaic_0001>

<llo_original>
// kernel: tpu_custom_call.1
$region0: #{tpu_custom_call.1}
  #allocation0 [shape = 'u32[]', space=smem, size = 0x4, offset = 0x4, fixed_abs, tag = 'smem constant byte address 0x4 - core index']
  #allocation1 [shape = 'u32[144,128]{1,0:T(1,128)}', space=vmem, size = 0x12000, scoped, tag = 'internal scratch']
  %s0 = inlined_call_operand.hbm [shape: f32[2,16,128], index: 0, kind: input, shape index: {}]
  %s1 = inlined_call_operand.hbm [shape: f32[2,16,256], index: 1, kind: input, shape index: {}]
  %s2 = inlined_call_operand.hbm [shape: f32[1,8,128], index: 2, kind: output, shape index: {}]
  %s3 = sld [smem:[#allocation0]]
  $region26: #{tpu_custom_call.1} parent=0
    _
  %s5 = ssub.s32 1, %s3
  %s6 = scalar_select 0, %s5, %s3
  $region1: #{tpu_custom_call.1} parent=0
    #allocation2 [shape = 'u8[16384]{0}', space=vmem, size = 0x4000, scoped, tag = 'input window, operand 0, single buffered']
    #allocation3 [shape = 's32[1]{0}', space=sflag, size = 0x4, scoped, tag = 'scoped memory for tpu_custom_call.1']
    #allocation4 [shape = 's32[1]{0}', space=sflag, size = 0x4, scoped, tag = 'scoped memory for tpu_custom_call.1']
    #allocation5 [shape = 'u8[32768]{0}', space=vmem, size = 0x8000, scoped, tag = 'input window, operand 1, single buffered']
    #allocation6 [shape = 's32[1]{0}', space=sflag, size = 0x4, scoped, tag = 'scoped memory for tpu_custom_call.1']
    #allocation7 [shape = 'u8[4096]{0}', space=vmem, size = 0x1000, scoped, tag = 'output window, operand 0, single buffered']
    %7 = vsyncpa [#allocation3], 0
    %8 = vsyncpa [#allocation6], 0
    %9 = vsyncpa [#allocation4], 0
    // Predicated region
    $region2: #{tpu_custom_call.1} parent=1 // pred_check
      _
    $region3: #{tpu_custom_call.1} parent=1 // pred_check_branch
      %11 = sbr.rel (0) target = $region5
    $region4: #{tpu_custom_call.1} parent=1 // pred_region
      %s13 = ssub.s32 512, 512
      %14 = vsyncadd [#allocation3], %s13
      %s15 = sshll.u32 [#allocation2], 4
      %s16 = int_to_ptr.vmem [resolvable:$true] %s15
      %21 = dma.hbm_to_vmem [thread:$0]  %s0, 512, %s16, [#allocation3], 128, 128, 8
    $region5: #{tpu_custom_call.1} parent=1 // pred_fallthru
      _
    // Predicated region
    $region6: #{tpu_custom_call.1} parent=1 // pred_check
      _
    $region7: #{tpu_custom_call.1} parent=1 // pred_check_branch
      %23 = sbr.rel (0) target = $region9
    $region8: #{tpu_custom_call.1} parent=1 // pred_region
      %s25 = ssub.s32 1024, 1024
      %26 = vsyncadd [#allocation6], %s25
      %s27 = sshll.u32 [#allocation5], 4
      %s28 = int_to_ptr.vmem [resolvable:$true] %s27
      %33 = dma.hbm_to_vmem [thread:$0]  %s1, 1024, %s28, [#allocation6], 256, 256, 16
    $region9: #{tpu_custom_call.1} parent=1 // pred_fallthru
      _
    // Predicated region
    $region10: #{tpu_custom_call.1} parent=1 // pred_check
      _
    $region11: #{tpu_custom_call.1} parent=1 // pred_check_branch
      %35 = sbr.rel (0) target = $region13
    $region12: #{tpu_custom_call.1} parent=1 // pred_region
      %36 = dma.done [#allocation3], 512
    $region13: #{tpu_custom_call.1} parent=1 // pred_fallthru
      _
    // Predicated region
    $region14: #{tpu_custom_call.1} parent=1 // pred_check
      _
    $region15: #{tpu_custom_call.1} parent=1 // pred_check_branch
      %38 = sbr.rel (0) target = $region17
    $region16: #{tpu_custom_call.1} parent=1 // pred_region
      %39 = dma.done [#allocation6], 1024
    $region17: #{tpu_custom_call.1} parent=1 // pred_fallthru
      _
    %v40 = vld [vmem:[#allocation2] sm:$0xff]
    %v41 = vld [vmem:[#allocation2 + $0x8] sm:$0xff]
    %v42 = vld [vmem:[#allocation2 + $0x10] sm:$0xff]
    %v43 = vld [vmem:[#allocation2 + $0x18] sm:$0xff]
    %v44 = vld [vmem:[#allocation5] sm:$0xff]
    %v45 = vld [vmem:[#allocation5 + $0x8] sm:$0xff]
    %v46 = vld [vmem:[#allocation5 + $0x10] sm:$0xff]
    %v47 = vld [vmem:[#allocation5 + $0x18] sm:$0xff]
    %v48 = vld [vmem:[#allocation5 + $0x20] sm:$0xff]
    %v49 = vld [vmem:[#allocation5 + $0x28] sm:$0xff]
    %v50 = vld [vmem:[#allocation5 + $0x30] sm:$0xff]
    %v51 = vld [vmem:[#allocation5 + $0x38] sm:$0xff]
    %v52 = vadd.f32 %v44, %v45
    %v53 = vadd.f32 %v46, %v47
    %v54 = vadd.f32 %v48, %v49
    %v55 = vadd.f32 %v50, %v51
    %vm60 = vcmask 1046528
    %v61 = vrot.slane %v52, 1
    %v62 = vrot.slane %v53, 1
    %v63 = vsel %vm60, %v61, %v62
    %v64 = vrot.slane %v54, 1
    %v65 = vrot.slane %v55, 1
    %v66 = vsel %vm60, %v64, %v65
    %v71 = vmul.f32 %v40, %v63
    %v72 = vmul.f32 %v41, %v62
    %v73 = vmul.f32 %v42, %v66
    %v74 = vmul.f32 %v43, %v65
    %75 = vadd.xlane.f32.xlu0 %v71
    %v76 = vpop.xlane.xlu0 %75
    %v77 = vsel %vm60, %v72, 0.0
    %78 = vadd.xlane.f32.xlu0 %v77
    %v79 = vpop.xlane.xlu0 %78
    %80 = vadd.xlane.f32.xlu0 %v73
    %v81 = vpop.xlane.xlu0 %80
    %v82 = vsel %vm60, %v74, 0.0
    %83 = vadd.xlane.f32.xlu0 %v82
    %v84 = vpop.xlane.xlu0 %83
    %85 = vadd.xlane.f32.xlu0 %v44
    %v86 = vpop.xlane.xlu0 %85
    %87 = vadd.xlane.f32.xlu0 %v46
    %v88 = vpop.xlane.xlu0 %87
    %89 = vadd.xlane.f32.xlu0 %v48
    %v90 = vpop.xlane.xlu0 %89
    %91 = vadd.xlane.f32.xlu0 %v50
    %v92 = vpop.xlane.xlu0 %91
    %s93 = smul.u32 0, 2
    %s94 = ssub.s32 2, %s93
    %v95 = vlaneseq
    %v96 = vshrl.u32 %v95, 7
    %v97 = vstv %s94
    %vm98 = vcmp.lt.s32.totalorder %v96, %v97
    %vm99 = vcmp.gt.f32.partialorder %v76, 0.0
    %vm100 = vcmp.gt.f32.partialorder %v79, 0.0
    %vm101 = vcmp.gt.f32.partialorder %v81, 0.0
    %vm102 = vcmp.gt.f32.partialorder %v84, 0.0
    %v103 = vsel %vm98, 1, 0
    %v104 = vlaneseq
    %v105 = vshrl.u32 %v104, 7
    %v106 = vsub.s32 0, %v105
    %v107 = vrot.slane %v103, %v106
    %v108 = vlaneseq
    %v109 = vshrl.u32 %v108, 7
    %v110 = vsub.s32 1, %v109
    %v111 = vrot.slane %v103, %v110
    %vm112 = vcmp.ne.s32.totalorder %v107, 0
    %vm113 = vcmp.ne.s32.totalorder %v111, 0
    %vm114 = vmand %vm99, %vm112
    %vm115 = vmand %vm100, %vm112
    %vm116 = vmand %vm101, %vm113
    %vm117 = vmand %vm102, %vm113
    %vm118 = vcmp.gt.f32.partialorder %v86, 0.5
    %vm119 = vcmp.gt.f32.partialorder %v88, 0.5
    %vm120 = vcmp.gt.f32.partialorder %v90, 0.5
    %vm121 = vcmp.gt.f32.partialorder %v92, 0.5
    %v122 = vsub.f32 1.0, %v76
    %v123 = vsub.f32 1.0, %v79
    %v124 = vsub.f32 1.0, %v81
    %v125 = vsub.f32 1.0, %v84
    %vm130 = vcmask 1040384
    %v131 = vrot.slane %v76, 7
    %v132 = vrot.slane %v79, 7
    %v133 = vsel %vm130, %v131, %v132
    %v134 = vrot.slane %v81, 7
    %v135 = vrot.slane %v84, 7
    %v136 = vsel %vm130, %v134, %v135
    %v145 = vrot.slane %v122, 7
    %v146 = vrot.slane %v123, 7
    %v147 = vsel %vm130, %v145, %v146
    %v148 = vrot.slane %v124, 7
    %v149 = vrot.slane %v125, 7
    %v150 = vsel %vm130, %v148, %v149
    %v155 = vsel %vm118, %v131, %v145
    %v156 = vsel %vm119, %v133, %v147
    %v157 = vsel %vm120, %v134, %v148
    %v158 = vsel %vm121, %v136, %v150
    %v163 = vrot.slane %v155, 1
    %v164 = vrot.slane %v156, 1
    %v165 = vsel %vm60, %v163, %v164
    %v166 = vrot.slane %v157, 1
    %v167 = vrot.slane %v158, 1
    %v168 = vsel %vm60, %v166, %v167
    %v173 = vsel %vm114, %v165, 1.0
    %v174 = vsel %vm115, %v164, 1.0
    %v175 = vsel %vm116, %v168, 1.0
    %v176 = vsel %vm117, %v167, 1.0
    %v177 = vlog2.pop %v173
    %v178 = vmul.f32 %v177, 0.6931472
    %v179 = vlog2.pop %v174
    %v180 = vmul.f32 %v179, 0.6931472
    %v181 = vlog2.pop %v175
    %v182 = vmul.f32 %v181, 0.6931472
    %v183 = vlog2.pop %v176
    %v184 = vmul.f32 %v183, 0.6931472
    %189 = vset.pattern.permute.xlu0 0
    %190 = vperm.xlu0 %189, %v178
    %v191 = vpop.permute.xlu0 %190
    %192 = vset.pattern.permute.xlu0 0
    %193 = vperm.xlu0 %192, %v180
    %v194 = vpop.permute.xlu0 %193
    %195 = vset.pattern.permute.xlu0 0
    %196 = vperm.xlu0 %195, %v182
    %v197 = vpop.permute.xlu0 %196
    %198 = vset.pattern.permute.xlu0 0
    %199 = vperm.xlu0 %198, %v184
    %v200 = vpop.permute.xlu0 %199
    %v201 = vlaneseq
    %v202 = vand.u32 %v201, 127
    %v203 = vlaneseq
    %v204 = vshrl.u32 %v203, 7
    %v205 = vsub.s32 %v202, %v204
    %v206 = vrot.slane %v191, %v205
    %v207 = vadd.s32 %v202, 4294967288
    %v208 = vlaneseq
    %v209 = vshrl.u32 %v208, 7
    %v210 = vsub.s32 %v207, %v209
    %v211 = vrot.slane %v194, %v210
    %vm212 = vcmask 130112
    %v213 = vsel %vm212, %v211, %v206
    %v214 = vlaneseq
    %v215 = vshrl.u32 %v214, 7
    %v216 = vsub.s32 %v202, %v215
    %v217 = vrot.slane %v197, %v216
    %v218 = vlaneseq
    %v219 = vshrl.u32 %v218, 7
    %v220 = vsub.s32 %v207, %v219
    %v221 = vrot.slane %v200, %v220
    %v222 = vsel %vm212, %v221, %v217
    %vm223 = vcmask 1041409
    %v224 = vsel %vm223, %v222, %v213
    %vm226 = vcmask 115712
    %v227 = vsel %vm226, %v224, 0.0
    %228 = vadd.xlane.f32.xlu0 %v227
    %v229 = vpop.xlane.xlu0 %228
    %v230 = vrot.slane %v229, 4
    %v231 = vadd.f32 %v229, %v230
    %v232 = vrot.slane %v231, 2
    %v233 = vadd.f32 %v231, %v232
    %v234 = vrot.slane %v233, 1
    %v235 = vadd.f32 %v233, %v234
    %s236 = vtos %v235
    %s237 = ssub.f32 0.0, %s236
    %v238 = vstv %s237
    %239 = vst [vmem:[#allocation7] sm:$0xff] %v238
    // Predicated region
    $region18: #{tpu_custom_call.1} parent=1 // pred_check
      _
    $region19: #{tpu_custom_call.1} parent=1 // pred_check_branch
      %241 = sbr.rel (0) target = $region21
    $region20: #{tpu_custom_call.1} parent=1 // pred_region
      %s243 = ssub.s32 128, 128
      %244 = vsyncadd [#allocation4], %s243
      %s246 = sshll.u32 [#allocation7], 4
      %s247 = int_to_ptr.vmem [resolvable:$true] %s246
      %249 = dma.vmem_to_hbm [thread:$0]  %s247, 128, %s2, [#allocation4]
    $region21: #{tpu_custom_call.1} parent=1 // pred_fallthru
      _
    // Predicated region
    $region22: #{tpu_custom_call.1} parent=1 // pred_check
      _
    $region23: #{tpu_custom_call.1} parent=1 // pred_check_branch
      %251 = sbr.rel (0) target = $region25
    $region24: #{tpu_custom_call.1} parent=1 // pred_region
      %252 = dma.done [#allocation4], 128
    $region25: #{tpu_custom_call.1} parent=1 // pred_fallthru
      _
    %253 = vsyncpa [#allocation3], 1
    %254 = vsyncpa [#allocation6], 1
    %255 = vsyncpa [#allocation4], 1

</llo_original>
